<compile_context>
chip_gen: v5e
topology: v5e:2x2
jax: 0.10.0
libtpu: 0.0.40
codegen_flags: <defaults>
</compile_context>

<pallas_src>
import functools

import jax
import jax.numpy as jnp
from jax import lax
from jax.experimental import pallas as pl
from jax.experimental.pallas import tpu as pltpu


def _attention_kernel(x_ref, wq_ref, wk_ref, wv_ref, wp_ref, bp_ref, bias_ref,
                      out_ref, attn_ref, o_scr, *, B, N, nh, qkd, d):
    """Single-step kernel: every batch and head in one invocation.

    x_ref:    (B*N, C)     tokens, flattened over batch
    wq_ref:   (C, nh*qkd)  attention scale already folded in
    wk_ref:   (C, nh*qkd)
    wv_ref:   (C, nh*d)
    wp_ref:   (nh*d, C)
    bp_ref:   (1, C)       projection bias
    bias_ref: (nh, N, N)   bias + head_bias, pre-summed
    out_ref:  (B*N, C)
    attn_ref: (B, nh, N, N)
    o_scr:    (B*N, nh*d)  VMEM scratch: attn @ v for all heads, pre-projection
    """
    x = x_ref[...]                                                    # (B*N, C)

    # Fused projections across all batches and heads (full-width MXU matmuls).
    q = jnp.dot(x, wq_ref[...], preferred_element_type=jnp.float32)  # (B*N, nh*qkd)
    k = jnp.dot(x, wk_ref[...], preferred_element_type=jnp.float32)  # (B*N, nh*qkd)
    v = jnp.dot(x, wv_ref[...], preferred_element_type=jnp.float32)  # (B*N, nh*d)

    # Per-(batch, head) attention core; B*nh = 8 so a static unroll is cheap.
    for b in range(B):
        r0 = b * N
        q_b = q[r0:r0 + N]                                            # (N, nh*qkd)
        k_b = k[r0:r0 + N]
        v_b = v[r0:r0 + N]
        for h in range(nh):
            qh = q_b[:, h * qkd:(h + 1) * qkd]                        # (N, qkd)
            kh = k_b[:, h * qkd:(h + 1) * qkd]                        # (N, qkd)
            # q @ k^T without materializing a transpose.
            s = lax.dot_general(qh, kh, (((1,), (1,)), ((), ())),
                                preferred_element_type=jnp.float32)   # (N, N)
            s = s + bias_ref[h]
            s = s - jnp.max(s, axis=-1, keepdims=True)
            e = jnp.exp(s)
            p = e * pl.reciprocal(jnp.sum(e, axis=-1, keepdims=True), approx=True)
            attn_ref[b, h] = p
            o_scr[r0:r0 + N, h * d:(h + 1) * d] = jnp.dot(
                p, v_b[:, h * d:(h + 1) * d], preferred_element_type=jnp.float32)

    # Fused output projection across all batches and heads.
    out_ref[...] = (jnp.dot(o_scr[...], wp_ref[...],
                            preferred_element_type=jnp.float32) + bp_ref[...])


def attention_forward(x, wq_t, wk_t, wv_t, wp_t, bp, bias, head_bias,
                      *, num_heads, scale):
    """x: (B, N, C); weights in `x @ W` (in, out) form.

    Returns (out (B, N, C), attn (B, nh, N, N)).
    """
    B, N, C = x.shape
    nh = num_heads
    qkd = wq_t.shape[-1] // nh
    d = wv_t.shape[-1] // nh

    # One-time parameter prep (wrapper side): fold scale into Wq, pre-sum the
    # two learned attention biases, and flatten tokens over batch.
    wq_s = (wq_t * scale).astype(jnp.float32)
    bias_comb = (bias[None, :, :] + head_bias).astype(jnp.float32)    # (nh, N, N)
    bp2 = bp.reshape(1, C).astype(jnp.float32)
    x2 = x.reshape(B * N, C).astype(jnp.float32)

    kernel = functools.partial(_attention_kernel, B=B, N=N, nh=nh, qkd=qkd, d=d)

    # No grid: the entire problem (a few tens of KB) runs as a single kernel
    # step with whole arrays resident in VMEM (fits easily on v5e/v6e/v7x).
    out2, attn = pl.pallas_call(
        kernel,
        out_shape=(
            jax.ShapeDtypeStruct((B * N, C), jnp.float32),
            jax.ShapeDtypeStruct((B, nh, N, N), jnp.float32),
        ),
        scratch_shapes=[pltpu.VMEM((B * N, nh * d), jnp.float32)],
    )(x2, wq_s, wk_t.astype(jnp.float32), wv_t.astype(jnp.float32),
      wp_t.astype(jnp.float32), bp2, bias_comb)

    return out2.reshape(B, N, C), attn


def reference_forward(x, wq_t, wk_t, wv_t, wp_t, bp, bias, head_bias,
                      *, num_heads, qk_head_dim, head_dim, scale):
    B, N, C = x.shape
    nh, qkd, d = num_heads, qk_head_dim, head_dim
    q = (x @ wq_t).reshape(B, N, nh, qkd).transpose(0, 2, 1, 3)
    k = (x @ wk_t).reshape(B, N, nh, qkd).transpose(0, 2, 1, 3)
    v = (x @ wv_t).reshape(B, N, nh, d).transpose(0, 2, 1, 3)
    q = q * scale
    attn = q @ jnp.swapaxes(k, -2, -1)
    attn = attn + bias
    attn = attn + head_bias
    attn = jax.nn.softmax(attn, axis=-1)
    o = attn @ v
    o = o.transpose(0, 2, 1, 3).reshape(B, N, C)
    o = o @ wp_t + bp
    return o, attn


if __name__ == "__main__":
    # small shapes consistent with the module: (B, N, C) tokens
    B, N, C = 2, 8, 32
    num_heads = 4
    head_dim = C // num_heads          # 8
    qk_head_dim = head_dim             # qk_head_dim=None -> head_dim
    scale = qk_head_dim ** (-0.5)

    key = jax.random.PRNGKey(0)
    kx, k1, k2, k3, k4, k5, k6, k7 = jax.random.split(key, 8)

    x = jax.random.normal(kx, (B, N, C), dtype=jnp.float32)

    # nn.Linear weights in "x @ W" (in, out) form
    wq_t = 0.05 * jax.random.normal(k1, (C, num_heads * qk_head_dim), jnp.float32)
    wk_t = 0.05 * jax.random.normal(k2, (C, num_heads * qk_head_dim), jnp.float32)
    wv_t = 0.05 * jax.random.normal(k3, (C, C), jnp.float32)
    wp_t = 0.05 * jax.random.normal(k4, (C, C), jnp.float32)
    bp = 0.05 * jax.random.normal(k5, (C,), jnp.float32)   # proj has bias=True

    # learned attention biases (module initializes them to zeros; use small
    # random values here to actually exercise the bias path)
    bias = 0.1 * jax.random.normal(k6, (N, N), jnp.float32)
    head_bias = 0.1 * jax.random.normal(k7, (num_heads, N, N), jnp.float32)

    out, attn = attention_forward(x, wq_t, wk_t, wv_t, wp_t, bp, bias, head_bias,
                                  num_heads=num_heads, scale=scale)
    jax.block_until_ready((out, attn))

    out_ref, attn_ref = reference_forward(
        x, wq_t, wk_t, wv_t, wp_t, bp, bias, head_bias,
        num_heads=num_heads, qk_head_dim=qk_head_dim,
        head_dim=head_dim, scale=scale)

    assert out.shape == (B, N, C) and attn.shape == (B, num_heads, N, N)
    # tolerance relaxed slightly for the EUP approx reciprocal in the softmax
    assert jnp.allclose(out, out_ref, atol=2e-3, rtol=2e-3), "output mismatch"
    assert jnp.allclose(attn, attn_ref, atol=2e-3, rtol=2e-3), "attn mismatch"

    print("KERNEL_OK")
</pallas_src>

<mosaic_0001>
module attributes {stable_mosaic.version = 11 : i64} {
  func.func @_attention_kernel(%arg0: memref<16x32xf32, #tpu.memory_space<vmem>>, %arg1: memref<32x32xf32, #tpu.memory_space<vmem>>, %arg2: memref<32x32xf32, #tpu.memory_space<vmem>>, %arg3: memref<32x32xf32, #tpu.memory_space<vmem>>, %arg4: memref<32x32xf32, #tpu.memory_space<vmem>>, %arg5: memref<1x32xf32, #tpu.memory_space<vmem>>, %arg6: memref<4x8x8xf32, #tpu.memory_space<vmem>>, %arg7: memref<16x32xf32, #tpu.memory_space<vmem>>, %arg8: memref<2x4x8x8xf32, #tpu.memory_space<vmem>>, %arg9: memref<16x32xf32, #tpu.memory_space<vmem>>) attributes {dimension_semantics = [], scalar_prefetch = 0 : i64, scratch_operands = 1 : i64, tpu.core_type = #tpu.core_type<tc>} {
    %c0 = arith.constant 0 : index
    %c0_0 = arith.constant 0 : index
    %0 = vector.load %arg0[%c0, %c0_0] : memref<16x32xf32, #tpu.memory_space<vmem>>, vector<16x32xf32>
    %c0_1 = arith.constant 0 : index
    %c0_2 = arith.constant 0 : index
    %1 = vector.load %arg1[%c0_1, %c0_2] : memref<32x32xf32, #tpu.memory_space<vmem>>, vector<32x32xf32>
    %cst = arith.constant dense<0.000000e+00> : vector<16x32xf32>
    %2 = tpu.matmul %0, %1, %cst {dimension_numbers = #tpu.dot_dimension_numbers<[1], [0], [0], [1], [0, 0, 1, 1], [], []>} : vector<16x32xf32>, vector<32x32xf32>, vector<16x32xf32> -> vector<16x32xf32>
    %c0_3 = arith.constant 0 : index
    %c0_4 = arith.constant 0 : index
    %3 = vector.load %arg2[%c0_3, %c0_4] : memref<32x32xf32, #tpu.memory_space<vmem>>, vector<32x32xf32>
    %cst_5 = arith.constant dense<0.000000e+00> : vector<16x32xf32>
    %4 = tpu.matmul %0, %3, %cst_5 {dimension_numbers = #tpu.dot_dimension_numbers<[1], [0], [0], [1], [0, 0, 1, 1], [], []>} : vector<16x32xf32>, vector<32x32xf32>, vector<16x32xf32> -> vector<16x32xf32>
    %c0_6 = arith.constant 0 : index
    %c0_7 = arith.constant 0 : index
    %5 = vector.load %arg3[%c0_6, %c0_7] : memref<32x32xf32, #tpu.memory_space<vmem>>, vector<32x32xf32>
    %cst_8 = arith.constant dense<0.000000e+00> : vector<16x32xf32>
    %6 = tpu.matmul %0, %5, %cst_8 {dimension_numbers = #tpu.dot_dimension_numbers<[1], [0], [0], [1], [0, 0, 1, 1], [], []>} : vector<16x32xf32>, vector<32x32xf32>, vector<16x32xf32> -> vector<16x32xf32>
    %7 = vector.extract_strided_slice %2 {offsets = [0, 0], sizes = [8, 32], strides = [1, 1]} : vector<16x32xf32> to vector<8x32xf32>
    %8 = vector.extract_strided_slice %4 {offsets = [0, 0], sizes = [8, 32], strides = [1, 1]} : vector<16x32xf32> to vector<8x32xf32>
    %9 = vector.extract_strided_slice %6 {offsets = [0, 0], sizes = [8, 32], strides = [1, 1]} : vector<16x32xf32> to vector<8x32xf32>
    %10 = vector.extract_strided_slice %7 {offsets = [0, 0], sizes = [8, 8], strides = [1, 1]} : vector<8x32xf32> to vector<8x8xf32>
    %11 = vector.extract_strided_slice %8 {offsets = [0, 0], sizes = [8, 8], strides = [1, 1]} : vector<8x32xf32> to vector<8x8xf32>
    %cst_9 = arith.constant dense<0.000000e+00> : vector<8x8xf32>
    %12 = tpu.matmul %10, %11, %cst_9 {dimension_numbers = #tpu.dot_dimension_numbers<[1], [1], [0], [0], [0, 0, 1, 0], [], []>} : vector<8x8xf32>, vector<8x8xf32>, vector<8x8xf32> -> vector<8x8xf32>
    %c0_10 = arith.constant 0 : index
    %c0_11 = arith.constant 0 : index
    %c0_12 = arith.constant 0 : index
    %13 = vector.load %arg6[%c0_10, %c0_11, %c0_12] : memref<4x8x8xf32, #tpu.memory_space<vmem>>, vector<1x8x8xf32>
    %14 = vector.shape_cast %13 : vector<1x8x8xf32> to vector<8x8xf32>
    %15 = arith.addf %12, %14 : vector<8x8xf32>
    %cst_13 = arith.constant dense<0xFF800000> : vector<8xf32>
    %16 = vector.multi_reduction <maximumf>, %15, %cst_13 [1] : vector<8x8xf32> to vector<8xf32>
    %17 = vector.shape_cast %16 : vector<8xf32> to vector<8x1xf32>
    %18 = vector.broadcast %17 : vector<8x1xf32> to vector<8x8xf32>
    %19 = arith.subf %15, %18 : vector<8x8xf32>
    %20 = math.exp %19 : vector<8x8xf32>
    %cst_14 = arith.constant dense<0.000000e+00> : vector<8xf32>
    %21 = vector.multi_reduction <add>, %20, %cst_14 [1] : vector<8x8xf32> to vector<8xf32>
    %22 = vector.shape_cast %21 : vector<8xf32> to vector<8x1xf32>
    %23 = tpu.reciprocal %22 {approx = true} : vector<8x1xf32> -> vector<8x1xf32>
    %24 = vector.broadcast %23 : vector<8x1xf32> to vector<8x8xf32>
    %25 = arith.mulf %20, %24 : vector<8x8xf32>
    %c0_15 = arith.constant 0 : index
    %c0_16 = arith.constant 0 : index
    %c0_17 = arith.constant 0 : index
    %c0_18 = arith.constant 0 : index
    %26 = vector.load %arg8[%c0_15, %c0_16, %c0_17, %c0_18] : memref<2x4x8x8xf32, #tpu.memory_space<vmem>>, vector<1x1x8x8xf32>
    %27 = vector.shape_cast %26 : vector<1x1x8x8xf32> to vector<8x8xf32>
    %28 = vector.shape_cast %25 : vector<8x8xf32> to vector<1x1x8x8xf32>
    tpu.vector_store %arg8[%c0_15, %c0_16, %c0_17, %c0_18], %28 {strides = array<i32>} : memref<2x4x8x8xf32, #tpu.memory_space<vmem>>, vector<1x1x8x8xf32>,
    %29 = vector.extract_strided_slice %9 {offsets = [0, 0], sizes = [8, 8], strides = [1, 1]} : vector<8x32xf32> to vector<8x8xf32>
    %cst_19 = arith.constant dense<0.000000e+00> : vector<8x8xf32>
    %30 = tpu.matmul %25, %29, %cst_19 {dimension_numbers = #tpu.dot_dimension_numbers<[1], [0], [0], [1], [0, 0, 1, 1], [], []>} : vector<8x8xf32>, vector<8x8xf32>, vector<8x8xf32> -> vector<8x8xf32>
    %c0_20 = arith.constant 0 : index
    %c0_21 = arith.constant 0 : index
    %31 = vector.load %arg9[%c0_20, %c0_21] : memref<16x32xf32, #tpu.memory_space<vmem>>, vector<8x8xf32>
    tpu.vector_store %arg9[%c0_20, %c0_21], %30 {strides = array<i32>} : memref<16x32xf32, #tpu.memory_space<vmem>>, vector<8x8xf32>,
    %32 = vector.extract_strided_slice %7 {offsets = [0, 8], sizes = [8, 8], strides = [1, 1]} : vector<8x32xf32> to vector<8x8xf32>
    %33 = vector.extract_strided_slice %8 {offsets = [0, 8], sizes = [8, 8], strides = [1, 1]} : vector<8x32xf32> to vector<8x8xf32>
    %cst_22 = arith.constant dense<0.000000e+00> : vector<8x8xf32>
    %34 = tpu.matmul %32, %33, %cst_22 {dimension_numbers = #tpu.dot_dimension_numbers<[1], [1], [0], [0], [0, 0, 1, 0], [], []>} : vector<8x8xf32>, vector<8x8xf32>, vector<8x8xf32> -> vector<8x8xf32>
    %c1 = arith.constant 1 : index
    %c0_23 = arith.constant 0 : index
    %c0_24 = arith.constant 0 : index
    %35 = vector.load %arg6[%c1, %c0_23, %c0_24] : memref<4x8x8xf32, #tpu.memory_space<vmem>>, vector<1x8x8xf32>
    %36 = vector.shape_cast %35 : vector<1x8x8xf32> to vector<8x8xf32>
    %37 = arith.addf %34, %36 : vector<8x8xf32>
    %cst_25 = arith.constant dense<0xFF800000> : vector<8xf32>
    %38 = vector.multi_reduction <maximumf>, %37, %cst_25 [1] : vector<8x8xf32> to vector<8xf32>
    %39 = vector.shape_cast %38 : vector<8xf32> to vector<8x1xf32>
    %40 = vector.broadcast %39 : vector<8x1xf32> to vector<8x8xf32>
    %41 = arith.subf %37, %40 : vector<8x8xf32>
    %42 = math.exp %41 : vector<8x8xf32>
    %cst_26 = arith.constant dense<0.000000e+00> : vector<8xf32>
    %43 = vector.multi_reduction <add>, %42, %cst_26 [1] : vector<8x8xf32> to vector<8xf32>
    %44 = vector.shape_cast %43 : vector<8xf32> to vector<8x1xf32>
    %45 = tpu.reciprocal %44 {approx = true} : vector<8x1xf32> -> vector<8x1xf32>
    %46 = vector.broadcast %45 : vector<8x1xf32> to vector<8x8xf32>
    %47 = arith.mulf %42, %46 : vector<8x8xf32>
    %c0_27 = arith.constant 0 : index
    %c1_28 = arith.constant 1 : index
    %c0_29 = arith.constant 0 : index
    %c0_30 = arith.constant 0 : index
    %48 = vector.load %arg8[%c0_27, %c1_28, %c0_29, %c0_30] : memref<2x4x8x8xf32, #tpu.memory_space<vmem>>, vector<1x1x8x8xf32>
    %49 = vector.shape_cast %48 : vector<1x1x8x8xf32> to vector<8x8xf32>
    %50 = vector.shape_cast %47 : vector<8x8xf32> to vector<1x1x8x8xf32>
    tpu.vector_store %arg8[%c0_27, %c1_28, %c0_29, %c0_30], %50 {strides = array<i32>} : memref<2x4x8x8xf32, #tpu.memory_space<vmem>>, vector<1x1x8x8xf32>,
    %51 = vector.extract_strided_slice %9 {offsets = [0, 8], sizes = [8, 8], strides = [1, 1]} : vector<8x32xf32> to vector<8x8xf32>
    %cst_31 = arith.constant dense<0.000000e+00> : vector<8x8xf32>
    %52 = tpu.matmul %47, %51, %cst_31 {dimension_numbers = #tpu.dot_dimension_numbers<[1], [0], [0], [1], [0, 0, 1, 1], [], []>} : vector<8x8xf32>, vector<8x8xf32>, vector<8x8xf32> -> vector<8x8xf32>
    %c0_32 = arith.constant 0 : index
    %c8 = arith.constant 8 : index
    %53 = vector.load %arg9[%c0_32, %c8] : memref<16x32xf32, #tpu.memory_space<vmem>>, vector<8x8xf32>
    tpu.vector_store %arg9[%c0_32, %c8], %52 {strides = array<i32>} : memref<16x32xf32, #tpu.memory_space<vmem>>, vector<8x8xf32>,
    %54 = vector.extract_strided_slice %7 {offsets = [0, 16], sizes = [8, 8], strides = [1, 1]} : vector<8x32xf32> to vector<8x8xf32>
    %55 = vector.extract_strided_slice %8 {offsets = [0, 16], sizes = [8, 8], strides = [1, 1]} : vector<8x32xf32> to vector<8x8xf32>
    %cst_33 = arith.constant dense<0.000000e+00> : vector<8x8xf32>
    %56 = tpu.matmul %54, %55, %cst_33 {dimension_numbers = #tpu.dot_dimension_numbers<[1], [1], [0], [0], [0, 0, 1, 0], [], []>} : vector<8x8xf32>, vector<8x8xf32>, vector<8x8xf32> -> vector<8x8xf32>
    %c2 = arith.constant 2 : index
    %c0_34 = arith.constant 0 : index
    %c0_35 = arith.constant 0 : index
    %57 = vector.load %arg6[%c2, %c0_34, %c0_35] : memref<4x8x8xf32, #tpu.memory_space<vmem>>, vector<1x8x8xf32>
    %58 = vector.shape_cast %57 : vector<1x8x8xf32> to vector<8x8xf32>
    %59 = arith.addf %56, %58 : vector<8x8xf32>
    %cst_36 = arith.constant dense<0xFF800000> : vector<8xf32>
    %60 = vector.multi_reduction <maximumf>, %59, %cst_36 [1] : vector<8x8xf32> to vector<8xf32>
    %61 = vector.shape_cast %60 : vector<8xf32> to vector<8x1xf32>
    %62 = vector.broadcast %61 : vector<8x1xf32> to vector<8x8xf32>
    %63 = arith.subf %59, %62 : vector<8x8xf32>
    %64 = math.exp %63 : vector<8x8xf32>
    %cst_37 = arith.constant dense<0.000000e+00> : vector<8xf32>
    %65 = vector.multi_reduction <add>, %64, %cst_37 [1] : vector<8x8xf32> to vector<8xf32>
    %66 = vector.shape_cast %65 : vector<8xf32> to vector<8x1xf32>
    %67 = tpu.reciprocal %66 {approx = true} : vector<8x1xf32> -> vector<8x1xf32>
    %68 = vector.broadcast %67 : vector<8x1xf32> to vector<8x8xf32>
    %69 = arith.mulf %64, %68 : vector<8x8xf32>
    %c0_38 = arith.constant 0 : index
    %c2_39 = arith.constant 2 : index
    %c0_40 = arith.constant 0 : index
    %c0_41 = arith.constant 0 : index
    %70 = vector.load %arg8[%c0_38, %c2_39, %c0_40, %c0_41] : memref<2x4x8x8xf32, #tpu.memory_space<vmem>>, vector<1x1x8x8xf32>
    %71 = vector.shape_cast %70 : vector<1x1x8x8xf32> to vector<8x8xf32>
    %72 = vector.shape_cast %69 : vector<8x8xf32> to vector<1x1x8x8xf32>
    tpu.vector_store %arg8[%c0_38, %c2_39, %c0_40, %c0_41], %72 {strides = array<i32>} : memref<2x4x8x8xf32, #tpu.memory_space<vmem>>, vector<1x1x8x8xf32>,
    %73 = vector.extract_strided_slice %9 {offsets = [0, 16], sizes = [8, 8], strides = [1, 1]} : vector<8x32xf32> to vector<8x8xf32>
    %cst_42 = arith.constant dense<0.000000e+00> : vector<8x8xf32>
    %74 = tpu.matmul %69, %73, %cst_42 {dimension_numbers = #tpu.dot_dimension_numbers<[1], [0], [0], [1], [0, 0, 1, 1], [], []>} : vector<8x8xf32>, vector<8x8xf32>, vector<8x8xf32> -> vector<8x8xf32>
    %c0_43 = arith.constant 0 : index
    %c16 = arith.constant 16 : index
    %75 = vector.load %arg9[%c0_43, %c16] : memref<16x32xf32, #tpu.memory_space<vmem>>, vector<8x8xf32>
    tpu.vector_store %arg9[%c0_43, %c16], %74 {strides = array<i32>} : memref<16x32xf32, #tpu.memory_space<vmem>>, vector<8x8xf32>,
    %76 = vector.extract_strided_slice %7 {offsets = [0, 24], sizes = [8, 8], strides = [1, 1]} : vector<8x32xf32> to vector<8x8xf32>
    %77 = vector.extract_strided_slice %8 {offsets = [0, 24], sizes = [8, 8], strides = [1, 1]} : vector<8x32xf32> to vector<8x8xf32>
    %cst_44 = arith.constant dense<0.000000e+00> : vector<8x8xf32>
    %78 = tpu.matmul %76, %77, %cst_44 {dimension_numbers = #tpu.dot_dimension_numbers<[1], [1], [0], [0], [0, 0, 1, 0], [], []>} : vector<8x8xf32>, vector<8x8xf32>, vector<8x8xf32> -> vector<8x8xf32>
    %c3 = arith.constant 3 : index
    %c0_45 = arith.constant 0 : index
    %c0_46 = arith.constant 0 : index
    %79 = vector.load %arg6[%c3, %c0_45, %c0_46] : memref<4x8x8xf32, #tpu.memory_space<vmem>>, vector<1x8x8xf32>
    %80 = vector.shape_cast %79 : vector<1x8x8xf32> to vector<8x8xf32>
    %81 = arith.addf %78, %80 : vector<8x8xf32>
    %cst_47 = arith.constant dense<0xFF800000> : vector<8xf32>
    %82 = vector.multi_reduction <maximumf>, %81, %cst_47 [1] : vector<8x8xf32> to vector<8xf32>
    %83 = vector.shape_cast %82 : vector<8xf32> to vector<8x1xf32>
    %84 = vector.broadcast %83 : vector<8x1xf32> to vector<8x8xf32>
    %85 = arith.subf %81, %84 : vector<8x8xf32>
    %86 = math.exp %85 : vector<8x8xf32>
    %cst_48 = arith.constant dense<0.000000e+00> : vector<8xf32>
    %87 = vector.multi_reduction <add>, %86, %cst_48 [1] : vector<8x8xf32> to vector<8xf32>
    %88 = vector.shape_cast %87 : vector<8xf32> to vector<8x1xf32>
    %89 = tpu.reciprocal %88 {approx = true} : vector<8x1xf32> -> vector<8x1xf32>
    %90 = vector.broadcast %89 : vector<8x1xf32> to vector<8x8xf32>
    %91 = arith.mulf %86, %90 : vector<8x8xf32>
    %c0_49 = arith.constant 0 : index
    %c3_50 = arith.constant 3 : index
    %c0_51 = arith.constant 0 : index
    %c0_52 = arith.constant 0 : index
    %92 = vector.load %arg8[%c0_49, %c3_50, %c0_51, %c0_52] : memref<2x4x8x8xf32, #tpu.memory_space<vmem>>, vector<1x1x8x8xf32>
    %93 = vector.shape_cast %92 : vector<1x1x8x8xf32> to vector<8x8xf32>
    %94 = vector.shape_cast %91 : vector<8x8xf32> to vector<1x1x8x8xf32>
    tpu.vector_store %arg8[%c0_49, %c3_50, %c0_51, %c0_52], %94 {strides = array<i32>} : memref<2x4x8x8xf32, #tpu.memory_space<vmem>>, vector<1x1x8x8xf32>,
    %95 = vector.extract_strided_slice %9 {offsets = [0, 24], sizes = [8, 8], strides = [1, 1]} : vector<8x32xf32> to vector<8x8xf32>
    %cst_53 = arith.constant dense<0.000000e+00> : vector<8x8xf32>
    %96 = tpu.matmul %91, %95, %cst_53 {dimension_numbers = #tpu.dot_dimension_numbers<[1], [0], [0], [1], [0, 0, 1, 1], [], []>} : vector<8x8xf32>, vector<8x8xf32>, vector<8x8xf32> -> vector<8x8xf32>
    %c0_54 = arith.constant 0 : index
    %c24 = arith.constant 24 : index
    %97 = vector.load %arg9[%c0_54, %c24] : memref<16x32xf32, #tpu.memory_space<vmem>>, vector<8x8xf32>
    tpu.vector_store %arg9[%c0_54, %c24], %96 {strides = array<i32>} : memref<16x32xf32, #tpu.memory_space<vmem>>, vector<8x8xf32>,
    %98 = vector.extract_strided_slice %2 {offsets = [8, 0], sizes = [8, 32], strides = [1, 1]} : vector<16x32xf32> to vector<8x32xf32>
    %99 = vector.extract_strided_slice %4 {offsets = [8, 0], sizes = [8, 32], strides = [1, 1]} : vector<16x32xf32> to vector<8x32xf32>
    %100 = vector.extract_strided_slice %6 {offsets = [8, 0], sizes = [8, 32], strides = [1, 1]} : vector<16x32xf32> to vector<8x32xf32>
    %101 = vector.extract_strided_slice %98 {offsets = [0, 0], sizes = [8, 8], strides = [1, 1]} : vector<8x32xf32> to vector<8x8xf32>
    %102 = vector.extract_strided_slice %99 {offsets = [0, 0], sizes = [8, 8], strides = [1, 1]} : vector<8x32xf32> to vector<8x8xf32>
    %cst_55 = arith.constant dense<0.000000e+00> : vector<8x8xf32>
    %103 = tpu.matmul %101, %102, %cst_55 {dimension_numbers = #tpu.dot_dimension_numbers<[1], [1], [0], [0], [0, 0, 1, 0], [], []>} : vector<8x8xf32>, vector<8x8xf32>, vector<8x8xf32> -> vector<8x8xf32>
    %c0_56 = arith.constant 0 : index
    %c0_57 = arith.constant 0 : index
    %c0_58 = arith.constant 0 : index
    %104 = vector.load %arg6[%c0_56, %c0_57, %c0_58] : memref<4x8x8xf32, #tpu.memory_space<vmem>>, vector<1x8x8xf32>
    %105 = vector.shape_cast %104 : vector<1x8x8xf32> to vector<8x8xf32>
    %106 = arith.addf %103, %105 : vector<8x8xf32>
    %cst_59 = arith.constant dense<0xFF800000> : vector<8xf32>
    %107 = vector.multi_reduction <maximumf>, %106, %cst_59 [1] : vector<8x8xf32> to vector<8xf32>
    %108 = vector.shape_cast %107 : vector<8xf32> to vector<8x1xf32>
    %109 = vector.broadcast %108 : vector<8x1xf32> to vector<8x8xf32>
    %110 = arith.subf %106, %109 : vector<8x8xf32>
    %111 = math.exp %110 : vector<8x8xf32>
    %cst_60 = arith.constant dense<0.000000e+00> : vector<8xf32>
    %112 = vector.multi_reduction <add>, %111, %cst_60 [1] : vector<8x8xf32> to vector<8xf32>
    %113 = vector.shape_cast %112 : vector<8xf32> to vector<8x1xf32>
    %114 = tpu.reciprocal %113 {approx = true} : vector<8x1xf32> -> vector<8x1xf32>
    %115 = vector.broadcast %114 : vector<8x1xf32> to vector<8x8xf32>
    %116 = arith.mulf %111, %115 : vector<8x8xf32>
    %c1_61 = arith.constant 1 : index
    %c0_62 = arith.constant 0 : index
    %c0_63 = arith.constant 0 : index
    %c0_64 = arith.constant 0 : index
    %117 = vector.load %arg8[%c1_61, %c0_62, %c0_63, %c0_64] : memref<2x4x8x8xf32, #tpu.memory_space<vmem>>, vector<1x1x8x8xf32>
    %118 = vector.shape_cast %117 : vector<1x1x8x8xf32> to vector<8x8xf32>
    %119 = vector.shape_cast %116 : vector<8x8xf32> to vector<1x1x8x8xf32>
    tpu.vector_store %arg8[%c1_61, %c0_62, %c0_63, %c0_64], %119 {strides = array<i32>} : memref<2x4x8x8xf32, #tpu.memory_space<vmem>>, vector<1x1x8x8xf32>,
    %120 = vector.extract_strided_slice %100 {offsets = [0, 0], sizes = [8, 8], strides = [1, 1]} : vector<8x32xf32> to vector<8x8xf32>
    %cst_65 = arith.constant dense<0.000000e+00> : vector<8x8xf32>
    %121 = tpu.matmul %116, %120, %cst_65 {dimension_numbers = #tpu.dot_dimension_numbers<[1], [0], [0], [1], [0, 0, 1, 1], [], []>} : vector<8x8xf32>, vector<8x8xf32>, vector<8x8xf32> -> vector<8x8xf32>
    %c8_66 = arith.constant 8 : index
    %c0_67 = arith.constant 0 : index
    %122 = vector.load %arg9[%c8_66, %c0_67] : memref<16x32xf32, #tpu.memory_space<vmem>>, vector<8x8xf32>
    tpu.vector_store %arg9[%c8_66, %c0_67], %121 {strides = array<i32>} : memref<16x32xf32, #tpu.memory_space<vmem>>, vector<8x8xf32>,
    %123 = vector.extract_strided_slice %98 {offsets = [0, 8], sizes = [8, 8], strides = [1, 1]} : vector<8x32xf32> to vector<8x8xf32>
    %124 = vector.extract_strided_slice %99 {offsets = [0, 8], sizes = [8, 8], strides = [1, 1]} : vector<8x32xf32> to vector<8x8xf32>
    %cst_68 = arith.constant dense<0.000000e+00> : vector<8x8xf32>
    %125 = tpu.matmul %123, %124, %cst_68 {dimension_numbers = #tpu.dot_dimension_numbers<[1], [1], [0], [0], [0, 0, 1, 0], [], []>} : vector<8x8xf32>, vector<8x8xf32>, vector<8x8xf32> -> vector<8x8xf32>
    %c1_69 = arith.constant 1 : index
    %c0_70 = arith.constant 0 : index
    %c0_71 = arith.constant 0 : index
    %126 = vector.load %arg6[%c1_69, %c0_70, %c0_71] : memref<4x8x8xf32, #tpu.memory_space<vmem>>, vector<1x8x8xf32>
    %127 = vector.shape_cast %126 : vector<1x8x8xf32> to vector<8x8xf32>
    %128 = arith.addf %125, %127 : vector<8x8xf32>
    %cst_72 = arith.constant dense<0xFF800000> : vector<8xf32>
    %129 = vector.multi_reduction <maximumf>, %128, %cst_72 [1] : vector<8x8xf32> to vector<8xf32>
    %130 = vector.shape_cast %129 : vector<8xf32> to vector<8x1xf32>
    %131 = vector.broadcast %130 : vector<8x1xf32> to vector<8x8xf32>
    %132 = arith.subf %128, %131 : vector<8x8xf32>
    %133 = math.exp %132 : vector<8x8xf32>
    %cst_73 = arith.constant dense<0.000000e+00> : vector<8xf32>
    %134 = vector.multi_reduction <add>, %133, %cst_73 [1] : vector<8x8xf32> to vector<8xf32>
    %135 = vector.shape_cast %134 : vector<8xf32> to vector<8x1xf32>
    %136 = tpu.reciprocal %135 {approx = true} : vector<8x1xf32> -> vector<8x1xf32>
    %137 = vector.broadcast %136 : vector<8x1xf32> to vector<8x8xf32>
    %138 = arith.mulf %133, %137 : vector<8x8xf32>
    %c1_74 = arith.constant 1 : index
    %c1_75 = arith.constant 1 : index
    %c0_76 = arith.constant 0 : index
    %c0_77 = arith.constant 0 : index
    %139 = vector.load %arg8[%c1_74, %c1_75, %c0_76, %c0_77] : memref<2x4x8x8xf32, #tpu.memory_space<vmem>>, vector<1x1x8x8xf32>
    %140 = vector.shape_cast %139 : vector<1x1x8x8xf32> to vector<8x8xf32>
    %141 = vector.shape_cast %138 : vector<8x8xf32> to vector<1x1x8x8xf32>
    tpu.vector_store %arg8[%c1_74, %c1_75, %c0_76, %c0_77], %141 {strides = array<i32>} : memref<2x4x8x8xf32, #tpu.memory_space<vmem>>, vector<1x1x8x8xf32>,
    %142 = vector.extract_strided_slice %100 {offsets = [0, 8], sizes = [8, 8], strides = [1, 1]} : vector<8x32xf32> to vector<8x8xf32>
    %cst_78 = arith.constant dense<0.000000e+00> : vector<8x8xf32>
    %143 = tpu.matmul %138, %142, %cst_78 {dimension_numbers = #tpu.dot_dimension_numbers<[1], [0], [0], [1], [0, 0, 1, 1], [], []>} : vector<8x8xf32>, vector<8x8xf32>, vector<8x8xf32> -> vector<8x8xf32>
    %c8_79 = arith.constant 8 : index
    %c8_80 = arith.constant 8 : index
    %144 = vector.load %arg9[%c8_79, %c8_80] : memref<16x32xf32, #tpu.memory_space<vmem>>, vector<8x8xf32>
    tpu.vector_store %arg9[%c8_79, %c8_80], %143 {strides = array<i32>} : memref<16x32xf32, #tpu.memory_space<vmem>>, vector<8x8xf32>,
    %145 = vector.extract_strided_slice %98 {offsets = [0, 16], sizes = [8, 8], strides = [1, 1]} : vector<8x32xf32> to vector<8x8xf32>
    %146 = vector.extract_strided_slice %99 {offsets = [0, 16], sizes = [8, 8], strides = [1, 1]} : vector<8x32xf32> to vector<8x8xf32>
    %cst_81 = arith.constant dense<0.000000e+00> : vector<8x8xf32>
    %147 = tpu.matmul %145, %146, %cst_81 {dimension_numbers = #tpu.dot_dimension_numbers<[1], [1], [0], [0], [0, 0, 1, 0], [], []>} : vector<8x8xf32>, vector<8x8xf32>, vector<8x8xf32> -> vector<8x8xf32>
    %c2_82 = arith.constant 2 : index
    %c0_83 = arith.constant 0 : index
    %c0_84 = arith.constant 0 : index
    %148 = vector.load %arg6[%c2_82, %c0_83, %c0_84] : memref<4x8x8xf32, #tpu.memory_space<vmem>>, vector<1x8x8xf32>
    %149 = vector.shape_cast %148 : vector<1x8x8xf32> to vector<8x8xf32>
    %150 = arith.addf %147, %149 : vector<8x8xf32>
    %cst_85 = arith.constant dense<0xFF800000> : vector<8xf32>
    %151 = vector.multi_reduction <maximumf>, %150, %cst_85 [1] : vector<8x8xf32> to vector<8xf32>
    %152 = vector.shape_cast %151 : vector<8xf32> to vector<8x1xf32>
    %153 = vector.broadcast %152 : vector<8x1xf32> to vector<8x8xf32>
    %154 = arith.subf %150, %153 : vector<8x8xf32>
    %155 = math.exp %154 : vector<8x8xf32>
    %cst_86 = arith.constant dense<0.000000e+00> : vector<8xf32>
    %156 = vector.multi_reduction <add>, %155, %cst_86 [1] : vector<8x8xf32> to vector<8xf32>
    %157 = vector.shape_cast %156 : vector<8xf32> to vector<8x1xf32>
    %158 = tpu.reciprocal %157 {approx = true} : vector<8x1xf32> -> vector<8x1xf32>
    %159 = vector.broadcast %158 : vector<8x1xf32> to vector<8x8xf32>
    %160 = arith.mulf %155, %159 : vector<8x8xf32>
    %c1_87 = arith.constant 1 : index
    %c2_88 = arith.constant 2 : index
    %c0_89 = arith.constant 0 : index
    %c0_90 = arith.constant 0 : index
    %161 = vector.load %arg8[%c1_87, %c2_88, %c0_89, %c0_90] : memref<2x4x8x8xf32, #tpu.memory_space<vmem>>, vector<1x1x8x8xf32>
    %162 = vector.shape_cast %161 : vector<1x1x8x8xf32> to vector<8x8xf32>
    %163 = vector.shape_cast %160 : vector<8x8xf32> to vector<1x1x8x8xf32>
    tpu.vector_store %arg8[%c1_87, %c2_88, %c0_89, %c0_90], %163 {strides = array<i32>} : memref<2x4x8x8xf32, #tpu.memory_space<vmem>>, vector<1x1x8x8xf32>,
    %164 = vector.extract_strided_slice %100 {offsets = [0, 16], sizes = [8, 8], strides = [1, 1]} : vector<8x32xf32> to vector<8x8xf32>
    %cst_91 = arith.constant dense<0.000000e+00> : vector<8x8xf32>
    %165 = tpu.matmul %160, %164, %cst_91 {dimension_numbers = #tpu.dot_dimension_numbers<[1], [0], [0], [1], [0, 0, 1, 1], [], []>} : vector<8x8xf32>, vector<8x8xf32>, vector<8x8xf32> -> vector<8x8xf32>
    %c8_92 = arith.constant 8 : index
    %c16_93 = arith.constant 16 : index
    %166 = vector.load %arg9[%c8_92, %c16_93] : memref<16x32xf32, #tpu.memory_space<vmem>>, vector<8x8xf32>
    tpu.vector_store %arg9[%c8_92, %c16_93], %165 {strides = array<i32>} : memref<16x32xf32, #tpu.memory_space<vmem>>, vector<8x8xf32>,
    %167 = vector.extract_strided_slice %98 {offsets = [0, 24], sizes = [8, 8], strides = [1, 1]} : vector<8x32xf32> to vector<8x8xf32>
    %168 = vector.extract_strided_slice %99 {offsets = [0, 24], sizes = [8, 8], strides = [1, 1]} : vector<8x32xf32> to vector<8x8xf32>
    %cst_94 = arith.constant dense<0.000000e+00> : vector<8x8xf32>
    %169 = tpu.matmul %167, %168, %cst_94 {dimension_numbers = #tpu.dot_dimension_numbers<[1], [1], [0], [0], [0, 0, 1, 0], [], []>} : vector<8x8xf32>, vector<8x8xf32>, vector<8x8xf32> -> vector<8x8xf32>
    %c3_95 = arith.constant 3 : index
    %c0_96 = arith.constant 0 : index
    %c0_97 = arith.constant 0 : index
    %170 = vector.load %arg6[%c3_95, %c0_96, %c0_97] : memref<4x8x8xf32, #tpu.memory_space<vmem>>, vector<1x8x8xf32>
    %171 = vector.shape_cast %170 : vector<1x8x8xf32> to vector<8x8xf32>
    %172 = arith.addf %169, %171 : vector<8x8xf32>
    %cst_98 = arith.constant dense<0xFF800000> : vector<8xf32>
    %173 = vector.multi_reduction <maximumf>, %172, %cst_98 [1] : vector<8x8xf32> to vector<8xf32>
    %174 = vector.shape_cast %173 : vector<8xf32> to vector<8x1xf32>
    %175 = vector.broadcast %174 : vector<8x1xf32> to vector<8x8xf32>
    %176 = arith.subf %172, %175 : vector<8x8xf32>
    %177 = math.exp %176 : vector<8x8xf32>
    %cst_99 = arith.constant dense<0.000000e+00> : vector<8xf32>
    %178 = vector.multi_reduction <add>, %177, %cst_99 [1] : vector<8x8xf32> to vector<8xf32>
    %179 = vector.shape_cast %178 : vector<8xf32> to vector<8x1xf32>
    %180 = tpu.reciprocal %179 {approx = true} : vector<8x1xf32> -> vector<8x1xf32>
    %181 = vector.broadcast %180 : vector<8x1xf32> to vector<8x8xf32>
    %182 = arith.mulf %177, %181 : vector<8x8xf32>
    %c1_100 = arith.constant 1 : index
    %c3_101 = arith.constant 3 : index
    %c0_102 = arith.constant 0 : index
    %c0_103 = arith.constant 0 : index
    %183 = vector.load %arg8[%c1_100, %c3_101, %c0_102, %c0_103] : memref<2x4x8x8xf32, #tpu.memory_space<vmem>>, vector<1x1x8x8xf32>
    %184 = vector.shape_cast %183 : vector<1x1x8x8xf32> to vector<8x8xf32>
    %185 = vector.shape_cast %182 : vector<8x8xf32> to vector<1x1x8x8xf32>
    tpu.vector_store %arg8[%c1_100, %c3_101, %c0_102, %c0_103], %185 {strides = array<i32>} : memref<2x4x8x8xf32, #tpu.memory_space<vmem>>, vector<1x1x8x8xf32>,
    %186 = vector.extract_strided_slice %100 {offsets = [0, 24], sizes = [8, 8], strides = [1, 1]} : vector<8x32xf32> to vector<8x8xf32>
    %cst_104 = arith.constant dense<0.000000e+00> : vector<8x8xf32>
    %187 = tpu.matmul %182, %186, %cst_104 {dimension_numbers = #tpu.dot_dimension_numbers<[1], [0], [0], [1], [0, 0, 1, 1], [], []>} : vector<8x8xf32>, vector<8x8xf32>, vector<8x8xf32> -> vector<8x8xf32>
    %c8_105 = arith.constant 8 : index
    %c24_106 = arith.constant 24 : index
    %188 = vector.load %arg9[%c8_105, %c24_106] : memref<16x32xf32, #tpu.memory_space<vmem>>, vector<8x8xf32>
    tpu.vector_store %arg9[%c8_105, %c24_106], %187 {strides = array<i32>} : memref<16x32xf32, #tpu.memory_space<vmem>>, vector<8x8xf32>,
    %c0_107 = arith.constant 0 : index
    %c0_108 = arith.constant 0 : index
    %189 = vector.load %arg9[%c0_107, %c0_108] : memref<16x32xf32, #tpu.memory_space<vmem>>, vector<16x32xf32>
    %c0_109 = arith.constant 0 : index
    %c0_110 = arith.constant 0 : index
    %190 = vector.load %arg4[%c0_109, %c0_110] : memref<32x32xf32, #tpu.memory_space<vmem>>, vector<32x32xf32>
    %cst_111 = arith.constant dense<0.000000e+00> : vector<16x32xf32>
    %191 = tpu.matmul %189, %190, %cst_111 {dimension_numbers = #tpu.dot_dimension_numbers<[1], [0], [0], [1], [0, 0, 1, 1], [], []>} : vector<16x32xf32>, vector<32x32xf32>, vector<16x32xf32> -> vector<16x32xf32>
    %c0_112 = arith.constant 0 : index
    %c0_113 = arith.constant 0 : index
    %192 = vector.load %arg5[%c0_112, %c0_113] : memref<1x32xf32, #tpu.memory_space<vmem>>, vector<1x32xf32>
    %193 = vector.broadcast %192 : vector<1x32xf32> to vector<16x32xf32>
    %194 = arith.addf %191, %193 : vector<16x32xf32>
    %c0_114 = arith.constant 0 : index
    %c0_115 = arith.constant 0 : index
    %195 = vector.load %arg7[%c0_114, %c0_115] : memref<16x32xf32, #tpu.memory_space<vmem>>, vector<16x32xf32>
    tpu.vector_store %arg7[%c0_114, %c0_115], %194 {strides = array<i32>} : memref<16x32xf32, #tpu.memory_space<vmem>>, vector<16x32xf32>,
    return
  }
}

</mosaic_0001>

<llo_original>
// kernel: tpu_custom_call.1
$region0: #{tpu_custom_call.1}
  #allocation0 [shape = 'u32[]', space=smem, size = 0x4, offset = 0x4, fixed_abs, tag = 'smem constant byte address 0x4 - core index']
  #allocation1 [shape = 'u32[72,128]{1,0:T(1,128)}', space=vmem, size = 0x9000, scoped, tag = 'internal scratch']
  #allocation2 [shape = 'f32[16,32]{1,0:T(8,128)}', space=vmem, size = 0x2000, scoped, tag = 'scratch operand']
  %s0 = inlined_call_operand.hbm [shape: f32[16,32], index: 0, kind: input, shape index: {}]
  %s1 = inlined_call_operand.hbm [shape: f32[32,32], index: 1, kind: input, shape index: {}]
  %s2 = inlined_call_operand.hbm [shape: f32[32,32], index: 2, kind: input, shape index: {}]
  %s3 = inlined_call_operand.hbm [shape: f32[32,32], index: 3, kind: input, shape index: {}]
  %s4 = inlined_call_operand.hbm [shape: f32[32,32], index: 4, kind: input, shape index: {}]
  %s5 = inlined_call_operand.vmem [shape: f32[1,32], index: 5, kind: input, shape index: {}]
  %s6 = inlined_call_operand.hbm [shape: f32[4,8,8], index: 6, kind: input, shape index: {}]
  %s7 = inlined_call_operand.hbm [shape: f32[16,32], index: 7, kind: output, shape index: {0}]
  %s8 = inlined_call_operand.hbm [shape: f32[2,4,8,8], index: 8, kind: output, shape index: {1}]
  %9 = xla_tuple %s7, %s8
  %s10 = sld [smem:[#allocation0]]
  $region70: #{tpu_custom_call.1} parent=0
    _
  %s12 = ssub.s32 1, %s10
  %s13 = scalar_select 0, %s12, %s10
  $region1: #{tpu_custom_call.1} parent=0
    #allocation3 [shape = 'u8[8192]{0}', space=vmem, size = 0x2000, scoped, tag = 'input window, operand 0, single buffered']
    #allocation4 [shape = 's32[1]{0}', space=sflag, size = 0x4, scoped, tag = 'scoped memory for tpu_custom_call.1']
    #allocation5 [shape = 's32[1]{0}', space=sflag, size = 0x4, scoped, tag = 'scoped memory for tpu_custom_call.1']
    #allocation6 [shape = 'u8[16384]{0}', space=vmem, size = 0x4000, scoped, tag = 'input window, operand 1, single buffered']
    #allocation7 [shape = 's32[1]{0}', space=sflag, size = 0x4, scoped, tag = 'scoped memory for tpu_custom_call.1']
    #allocation8 [shape = 'u8[16384]{0}', space=vmem, size = 0x4000, scoped, tag = 'input window, operand 2, single buffered']
    #allocation9 [shape = 'u8[16384]{0}', space=vmem, size = 0x4000, scoped, tag = 'input window, operand 3, single buffered']
    #allocation10 [shape = 's32[1]{0}', space=sflag, size = 0x4, scoped, tag = 'scoped memory for tpu_custom_call.1']
    #allocation11 [shape = 'u8[16384]{0}', space=vmem, size = 0x4000, scoped, tag = 'input window, operand 4, single buffered']
    #allocation12 [shape = 'u8[16384]{0}', space=vmem, size = 0x4000, scoped, tag = 'input window, operand 6, single buffered']
    #allocation13 [shape = 's32[1]{0}', space=sflag, size = 0x4, scoped, tag = 'scoped memory for tpu_custom_call.1']
    #allocation14 [shape = 'u8[8192]{0}', space=vmem, size = 0x2000, scoped, tag = 'output window, operand 0, single buffered']
    #allocation15 [shape = 'u8[32768]{0}', space=vmem, size = 0x8000, scoped, tag = 'output window, operand 1, single buffered']
    #allocation16 [shape = 's32[1]{0}', space=sflag, size = 0x4, scoped, tag = 'scoped memory for tpu_custom_call.1']
    %14 = vsyncpa [#allocation4], 0
    %15 = vsyncpa [#allocation7], 0
    %16 = vsyncpa [#allocation10], 0
    %17 = vsyncpa [#allocation13], 0
    %18 = vsyncpa [#allocation5], 0
    %19 = vsyncpa [#allocation16], 0
    // Predicated region
    $region2: #{tpu_custom_call.1} parent=1 // pred_check
      _
    $region3: #{tpu_custom_call.1} parent=1 // pred_check_branch
      %21 = sbr.rel (0) target = $region5
    $region4: #{tpu_custom_call.1} parent=1 // pred_region
      %23 = vsyncadd [#allocation4], 0
      %s24 = sshll.u32 %s0, 4
      %s25 = int_to_ptr.hbm [resolvable:$true] %s24
      %s26 = sshll.u32 [#allocation3], 4
      %s27 = int_to_ptr.vmem [resolvable:$true] %s26
      %32 = dma.hbm_to_vmem [thread:$0]  %s25, 256, %s27, [#allocation4], 128, 128, 8
    $region5: #{tpu_custom_call.1} parent=1 // pred_fallthru
      _
    // Predicated region
    $region6: #{tpu_custom_call.1} parent=1 // pred_check
      _
    $region7: #{tpu_custom_call.1} parent=1 // pred_check_branch
      %34 = sbr.rel (0) target = $region9
    $region8: #{tpu_custom_call.1} parent=1 // pred_region
      %36 = vsyncadd [#allocation7], 0
      %s37 = sshll.u32 %s1, 4
      %s38 = int_to_ptr.hbm [resolvable:$true] %s37
      %s39 = sshll.u32 [#allocation6], 4
      %s40 = int_to_ptr.vmem [resolvable:$true] %s39
      %45 = dma.hbm_to_vmem [thread:$0]  %s38, 512, %s40, [#allocation7], 128, 128, 8
    $region9: #{tpu_custom_call.1} parent=1 // pred_fallthru
      _
    // Predicated region
    $region10: #{tpu_custom_call.1} parent=1 // pred_check
      _
    $region11: #{tpu_custom_call.1} parent=1 // pred_check_branch
      %47 = sbr.rel (0) target = $region13
    $region12: #{tpu_custom_call.1} parent=1 // pred_region
      %49 = vsyncadd [#allocation7], 0
      %s50 = sshll.u32 %s2, 4
      %s51 = int_to_ptr.hbm [resolvable:$true] %s50
      %s52 = sshll.u32 [#allocation8], 4
      %s53 = int_to_ptr.vmem [resolvable:$true] %s52
      %58 = dma.hbm_to_vmem [thread:$0]  %s51, 512, %s53, [#allocation7], 128, 128, 8
    $region13: #{tpu_custom_call.1} parent=1 // pred_fallthru
      _
    // Predicated region
    $region14: #{tpu_custom_call.1} parent=1 // pred_check
      _
    $region15: #{tpu_custom_call.1} parent=1 // pred_check_branch
      %60 = sbr.rel (0) target = $region17
    $region16: #{tpu_custom_call.1} parent=1 // pred_region
      %62 = vsyncadd [#allocation10], 0
      %s63 = sshll.u32 %s3, 4
      %s64 = int_to_ptr.hbm [resolvable:$true] %s63
      %s65 = sshll.u32 [#allocation9], 4
      %s66 = int_to_ptr.vmem [resolvable:$true] %s65
      %71 = dma.hbm_to_vmem [thread:$0]  %s64, 512, %s66, [#allocation10], 128, 128, 8
    $region17: #{tpu_custom_call.1} parent=1 // pred_fallthru
      _
    // Predicated region
    $region18: #{tpu_custom_call.1} parent=1 // pred_check
      _
    $region19: #{tpu_custom_call.1} parent=1 // pred_check_branch
      %73 = sbr.rel (0) target = $region21
    $region20: #{tpu_custom_call.1} parent=1 // pred_region
      %75 = vsyncadd [#allocation10], 0
      %s76 = sshll.u32 %s4, 4
      %s77 = int_to_ptr.hbm [resolvable:$true] %s76
      %s78 = sshll.u32 [#allocation11], 4
      %s79 = int_to_ptr.vmem [resolvable:$true] %s78
      %84 = dma.hbm_to_vmem [thread:$0]  %s77, 512, %s79, [#allocation10], 128, 128, 8
    $region21: #{tpu_custom_call.1} parent=1 // pred_fallthru
      _
    // Predicated region
    $region22: #{tpu_custom_call.1} parent=1 // pred_check
      _
    $region23: #{tpu_custom_call.1} parent=1 // pred_check_branch
      %86 = sbr.rel (0) target = $region25
    $region24: #{tpu_custom_call.1} parent=1 // pred_region
      _
    $region25: #{tpu_custom_call.1} parent=1 // pred_fallthru
      _
    // Predicated region
    $region26: #{tpu_custom_call.1} parent=1 // pred_check
      _
    $region27: #{tpu_custom_call.1} parent=1 // pred_check_branch
      %88 = sbr.rel (0) target = $region29
    $region28: #{tpu_custom_call.1} parent=1 // pred_region
      %90 = vsyncadd [#allocation13], 0
      %s91 = sshll.u32 %s6, 4
      %s92 = int_to_ptr.hbm [resolvable:$true] %s91
      %s93 = sshll.u32 [#allocation12], 4
      %s94 = int_to_ptr.vmem [resolvable:$true] %s93
      %99 = dma.hbm_to_vmem [thread:$0]  %s92, 512, %s94, [#allocation13], 128, 128, 8
    $region29: #{tpu_custom_call.1} parent=1 // pred_fallthru
      _
    // Predicated region
    $region30: #{tpu_custom_call.1} parent=1 // pred_check
      _
    $region31: #{tpu_custom_call.1} parent=1 // pred_check_branch
      %101 = sbr.rel (0) target = $region33
    $region32: #{tpu_custom_call.1} parent=1 // pred_region
      %103 = dma.done [#allocation4], 256
    $region33: #{tpu_custom_call.1} parent=1 // pred_fallthru
      _
    // Predicated region
    $region34: #{tpu_custom_call.1} parent=1 // pred_check
      _
    $region35: #{tpu_custom_call.1} parent=1 // pred_check_branch
      %105 = sbr.rel (0) target = $region37
    $region36: #{tpu_custom_call.1} parent=1 // pred_region
      %107 = dma.done [#allocation7], 512
    $region37: #{tpu_custom_call.1} parent=1 // pred_fallthru
      _
    // Predicated region
    $region38: #{tpu_custom_call.1} parent=1 // pred_check
      _
    $region39: #{tpu_custom_call.1} parent=1 // pred_check_branch
      %109 = sbr.rel (0) target = $region41
    $region40: #{tpu_custom_call.1} parent=1 // pred_region
      %111 = dma.done [#allocation7], 512
    $region41: #{tpu_custom_call.1} parent=1 // pred_fallthru
      _
    // Predicated region
    $region42: #{tpu_custom_call.1} parent=1 // pred_check
      _
    $region43: #{tpu_custom_call.1} parent=1 // pred_check_branch
      %113 = sbr.rel (0) target = $region45
    $region44: #{tpu_custom_call.1} parent=1 // pred_region
      %115 = dma.done [#allocation10], 512
    $region45: #{tpu_custom_call.1} parent=1 // pred_fallthru
      _
    // Predicated region
    $region46: #{tpu_custom_call.1} parent=1 // pred_check
      _
    $region47: #{tpu_custom_call.1} parent=1 // pred_check_branch
      %117 = sbr.rel (0) target = $region49
    $region48: #{tpu_custom_call.1} parent=1 // pred_region
      %119 = dma.done [#allocation10], 512
    $region49: #{tpu_custom_call.1} parent=1 // pred_fallthru
      _
    // Predicated region
    $region50: #{tpu_custom_call.1} parent=1 // pred_check
      _
    $region51: #{tpu_custom_call.1} parent=1 // pred_check_branch
      %121 = sbr.rel (0) target = $region53
    $region52: #{tpu_custom_call.1} parent=1 // pred_region
      %123 = dma.done [#allocation13], 512
    $region53: #{tpu_custom_call.1} parent=1 // pred_fallthru
      _
    %v124 = vld [vmem:[#allocation3] sm:$0xff]
    %v125 = vld [vmem:[#allocation3 + $0x8] sm:$0xff]
    %v126 = vld [vmem:[#allocation6] sm:$0xff]
    %v127 = vld [vmem:[#allocation6 + $0x8] sm:$0xff]
    %v128 = vld [vmem:[#allocation6 + $0x10] sm:$0xff]
    %v129 = vld [vmem:[#allocation6 + $0x18] sm:$0xff]
    %vm130 = vcmask 261120
    %v132 = vsel %vm130, %v124, 0
    %v135 = vsel %vm130, %v125, 0
    %137 = vmatpush.msra.mxu0 0.0
    %138 = vmatpush.msra.mxu0 0.0
    %139 = vmatpush.msra.mxu0 0.0
    %140 = vmatpush.msra.mxu0 0.0
    %141 = vmatpush.msra.mxu0 0.0
    %142 = vmatpush.msra.mxu0 0.0
    %143 = vmatpush.msra.mxu0 0.0
    %144 = vmatpush.msra.mxu0 0.0
    %145 = vmatpush.msra.mxu0 0.0
    %146 = vmatpush.msra.mxu0 0.0
    %147 = vmatpush.msra.mxu0 0.0
    %148 = vmatpush.msra.mxu0 0.0
    %149 = vmatpush.msra.mxu0 %v129
    %150 = vmatpush.msra.mxu0 %v128
    %151 = vmatpush.msra.mxu0 %v127
    %152 = vmatpush.msra.mxu0 %v126
    %153 = vmatmul.f32.gmra.mxu0 %v132
    %v154 = vpop.f32.mrf.mxu0
    %v155 = vadd.f32 0.0, %v154
    %156 = vmatmul.f32.gmra.mxu0 %v135
    %v157 = vpop.f32.mrf.mxu0
    %v158 = vadd.f32 0.0, %v157
    %159 = vdwg.mxu0
    %v160 = vld [vmem:[#allocation8] sm:$0xff]
    %v161 = vld [vmem:[#allocation8 + $0x8] sm:$0xff]
    %v162 = vld [vmem:[#allocation8 + $0x10] sm:$0xff]
    %v163 = vld [vmem:[#allocation8 + $0x18] sm:$0xff]
    %164 = vmatpush.msra.mxu0 0.0
    %165 = vmatpush.msra.mxu0 0.0
    %166 = vmatpush.msra.mxu0 0.0
    %167 = vmatpush.msra.mxu0 0.0
    %168 = vmatpush.msra.mxu0 0.0
    %169 = vmatpush.msra.mxu0 0.0
    %170 = vmatpush.msra.mxu0 0.0
    %171 = vmatpush.msra.mxu0 0.0
    %172 = vmatpush.msra.mxu0 0.0
    %173 = vmatpush.msra.mxu0 0.0
    %174 = vmatpush.msra.mxu0 0.0
    %175 = vmatpush.msra.mxu0 0.0
    %176 = vmatpush.msra.mxu0 %v163
    %177 = vmatpush.msra.mxu0 %v162
    %178 = vmatpush.msra.mxu0 %v161
    %179 = vmatpush.msra.mxu0 %v160
    %180 = vmatmul.f32.gmra.mxu0 %v132
    %v181 = vpop.f32.mrf.mxu0
    %v182 = vadd.f32 0.0, %v181
    %183 = vmatmul.f32.gmra.mxu0 %v135
    %v184 = vpop.f32.mrf.mxu0
    %v185 = vadd.f32 0.0, %v184
    %186 = vdwg.mxu0
    %v187 = vld [vmem:[#allocation9] sm:$0xff]
    %v188 = vld [vmem:[#allocation9 + $0x8] sm:$0xff]
    %v189 = vld [vmem:[#allocation9 + $0x10] sm:$0xff]
    %v190 = vld [vmem:[#allocation9 + $0x18] sm:$0xff]
    %191 = vmatpush.msra.mxu0 0.0
    %192 = vmatpush.msra.mxu0 0.0
    %193 = vmatpush.msra.mxu0 0.0
    %194 = vmatpush.msra.mxu0 0.0
    %195 = vmatpush.msra.mxu0 0.0
    %196 = vmatpush.msra.mxu0 0.0
    %197 = vmatpush.msra.mxu0 0.0
    %198 = vmatpush.msra.mxu0 0.0
    %199 = vmatpush.msra.mxu0 0.0
    %200 = vmatpush.msra.mxu0 0.0
    %201 = vmatpush.msra.mxu0 0.0
    %202 = vmatpush.msra.mxu0 0.0
    %203 = vmatpush.msra.mxu0 %v190
    %204 = vmatpush.msra.mxu0 %v189
    %205 = vmatpush.msra.mxu0 %v188
    %206 = vmatpush.msra.mxu0 %v187
    %207 = vmatmul.f32.gmra.mxu0 %v132
    %v208 = vpop.f32.mrf.mxu0
    %v209 = vadd.f32 0.0, %v208
    %210 = vmatmul.f32.gmra.mxu0 %v135
    %v211 = vpop.f32.mrf.mxu0
    %v212 = vadd.f32 0.0, %v211
    %213 = vdwg.mxu0
    %v214 = vld [vmem:[#allocation12] sm:$0xff]
    %vm215 = vcmask 64512
    %v217 = vsel %vm215, %v155, 0
    %v220 = vsel %vm215, %v182, 0
    %222 = vmatpush.xpose.msra.mxu0 0.0
    %223 = vmatpush.xpose.msra.mxu0 0.0
    %224 = vmatpush.xpose.msra.mxu0 0.0
    %225 = vmatpush.xpose.msra.mxu0 0.0
    %226 = vmatpush.xpose.msra.mxu0 0.0
    %227 = vmatpush.xpose.msra.mxu0 0.0
    %228 = vmatpush.xpose.msra.mxu0 0.0
    %229 = vmatpush.xpose.msra.mxu0 0.0
    %230 = vmatpush.xpose.msra.mxu0 0.0
    %231 = vmatpush.xpose.msra.mxu0 0.0
    %232 = vmatpush.xpose.msra.mxu0 0.0
    %233 = vmatpush.xpose.msra.mxu0 0.0
    %234 = vmatpush.xpose.msra.mxu0 0.0
    %235 = vmatpush.xpose.msra.mxu0 0.0
    %236 = vmatpush.xpose.msra.mxu0 0.0
    %237 = vmatpush.xpose.msra.mxu0 %v220
    %238 = vmatmul.f32.gmra.mxu0 %v217
    %v239 = vpop.f32.mrf.mxu0
    %v240 = vadd.f32 %v214, %v239
    %241 = vdwg.mxu0
    %v242 = vsel %vm215, %v240, -inf
    %243 = vmax.xlane.f32.xlu0 %v242
    %v244 = vpop.xlane.xlu0 %243
    %v245 = vsub.f32 %v240, %v244
    %v246 = vmul.f32 %v245, 1.442695
    %v247 = vpow.pop %v246
    %v248 = vsel %vm215, %v247, 0.0
    %249 = vadd.xlane.f32.xlu0 %v248
    %v250 = vpop.xlane.xlu0 %249
    %v251 = vrcp.pop %v250
    %v252 = vmul.f32 %v247, %v251
    %253 = vst.msk [vmem:[#allocation15] sm:$0xff] %vm215, %v252
    %v255 = vsel %vm215, %v252, 0
    %257 = vmatpush.msra.mxu0 0.0
    %258 = vmatpush.msra.mxu0 0.0
    %259 = vmatpush.msra.mxu0 0.0
    %260 = vmatpush.msra.mxu0 0.0
    %261 = vmatpush.msra.mxu0 0.0
    %262 = vmatpush.msra.mxu0 0.0
    %263 = vmatpush.msra.mxu0 0.0
    %264 = vmatpush.msra.mxu0 0.0
    %265 = vmatpush.msra.mxu0 0.0
    %266 = vmatpush.msra.mxu0 0.0
    %267 = vmatpush.msra.mxu0 0.0
    %268 = vmatpush.msra.mxu0 0.0
    %269 = vmatpush.msra.mxu0 0.0
    %270 = vmatpush.msra.mxu0 0.0
    %271 = vmatpush.msra.mxu0 0.0
    %272 = vmatpush.msra.mxu0 %v209
    %273 = vmatmul.f32.gmra.mxu0 %v255
    %v274 = vpop.f32.mrf.mxu0
    %v275 = vadd.f32 0.0, %v274
    %276 = vdwg.mxu0
    %277 = vst.msk [vmem:[#allocation2] sm:$0xff] %vm215, %v275
    %s278 = scalar_lea.vmem [#allocation12], 8
    %v279 = vld [vmem:[%s278] sm:$0xff]
    %280 = vrot.lane.b32.xlu0 %v155, 120
    %v281 = vpop.permute.xlu0 %280
    %282 = vrot.lane.b32.xlu0 %v182, 120
    %v283 = vpop.permute.xlu0 %282
    %v284 = vsel %vm215, %v281, 0
    %v286 = vsel %vm215, %v283, 0
    %288 = vmatpush.xpose.msra.mxu0 0.0
    %289 = vmatpush.xpose.msra.mxu0 0.0
    %290 = vmatpush.xpose.msra.mxu0 0.0
    %291 = vmatpush.xpose.msra.mxu0 0.0
    %292 = vmatpush.xpose.msra.mxu0 0.0
    %293 = vmatpush.xpose.msra.mxu0 0.0
    %294 = vmatpush.xpose.msra.mxu0 0.0
    %295 = vmatpush.xpose.msra.mxu0 0.0
    %296 = vmatpush.xpose.msra.mxu0 0.0
    %297 = vmatpush.xpose.msra.mxu0 0.0
    %298 = vmatpush.xpose.msra.mxu0 0.0
    %299 = vmatpush.xpose.msra.mxu0 0.0
    %300 = vmatpush.xpose.msra.mxu0 0.0
    %301 = vmatpush.xpose.msra.mxu0 0.0
    %302 = vmatpush.xpose.msra.mxu0 0.0
    %303 = vmatpush.xpose.msra.mxu0 %v286
    %304 = vmatmul.f32.gmra.mxu0 %v284
    %v305 = vpop.f32.mrf.mxu0
    %v306 = vadd.f32 %v279, %v305
    %307 = vdwg.mxu0
    %v308 = vsel %vm215, %v306, -inf
    %309 = vmax.xlane.f32.xlu0 %v308
    %v310 = vpop.xlane.xlu0 %309
    %v311 = vsub.f32 %v306, %v310
    %v312 = vmul.f32 %v311, 1.442695
    %v313 = vpow.pop %v312
    %v314 = vsel %vm215, %v313, 0.0
    %315 = vadd.xlane.f32.xlu0 %v314
    %v316 = vpop.xlane.xlu0 %315
    %v317 = vrcp.pop %v316
    %v318 = vmul.f32 %v313, %v317
    %s319 = scalar_lea.vmem [#allocation15], 8
    %320 = vst.msk [vmem:[%s319] sm:$0xff] %vm215, %v318
    %322 = vrot.lane.b32.xlu0 %v209, 120
    %v323 = vpop.permute.xlu0 %322
    %v326 = vsel %vm215, %v318, 0
    %328 = vmatpush.msra.mxu0 0.0
    %329 = vmatpush.msra.mxu0 0.0
    %330 = vmatpush.msra.mxu0 0.0
    %331 = vmatpush.msra.mxu0 0.0
    %332 = vmatpush.msra.mxu0 0.0
    %333 = vmatpush.msra.mxu0 0.0
    %334 = vmatpush.msra.mxu0 0.0
    %335 = vmatpush.msra.mxu0 0.0
    %336 = vmatpush.msra.mxu0 0.0
    %337 = vmatpush.msra.mxu0 0.0
    %338 = vmatpush.msra.mxu0 0.0
    %339 = vmatpush.msra.mxu0 0.0
    %340 = vmatpush.msra.mxu0 0.0
    %341 = vmatpush.msra.mxu0 0.0
    %342 = vmatpush.msra.mxu0 0.0
    %343 = vmatpush.msra.mxu0 %v323
    %344 = vmatmul.f32.gmra.mxu0 %v326
    %v345 = vpop.f32.mrf.mxu0
    %v346 = vadd.f32 0.0, %v345
    %347 = vdwg.mxu0
    %349 = vrot.lane.b32.xlu0 %v346, 8
    %v350 = vpop.permute.xlu0 %349
    %vm352 = vcmask 130112
    %353 = vst.msk [vmem:[#allocation2] sm:$0xff] %vm352, %v350
    %s354 = scalar_lea.vmem [#allocation12], 16
    %v355 = vld [vmem:[%s354] sm:$0xff]
    %356 = vrot.lane.b32.xlu0 %v155, 112
    %v357 = vpop.permute.xlu0 %356
    %358 = vrot.lane.b32.xlu0 %v182, 112
    %v359 = vpop.permute.xlu0 %358
    %v360 = vsel %vm215, %v357, 0
    %v362 = vsel %vm215, %v359, 0
    %364 = vmatpush.xpose.msra.mxu0 0.0
    %365 = vmatpush.xpose.msra.mxu0 0.0
    %366 = vmatpush.xpose.msra.mxu0 0.0
    %367 = vmatpush.xpose.msra.mxu0 0.0
    %368 = vmatpush.xpose.msra.mxu0 0.0
    %369 = vmatpush.xpose.msra.mxu0 0.0
    %370 = vmatpush.xpose.msra.mxu0 0.0
    %371 = vmatpush.xpose.msra.mxu0 0.0
    %372 = vmatpush.xpose.msra.mxu0 0.0
    %373 = vmatpush.xpose.msra.mxu0 0.0
    %374 = vmatpush.xpose.msra.mxu0 0.0
    %375 = vmatpush.xpose.msra.mxu0 0.0
    %376 = vmatpush.xpose.msra.mxu0 0.0
    %377 = vmatpush.xpose.msra.mxu0 0.0
    %378 = vmatpush.xpose.msra.mxu0 0.0
    %379 = vmatpush.xpose.msra.mxu0 %v362
    %380 = vmatmul.f32.gmra.mxu0 %v360
    %v381 = vpop.f32.mrf.mxu0
    %v382 = vadd.f32 %v355, %v381
    %383 = vdwg.mxu0
    %v384 = vsel %vm215, %v382, -inf
    %385 = vmax.xlane.f32.xlu0 %v384
    %v386 = vpop.xlane.xlu0 %385
    %v387 = vsub.f32 %v382, %v386
    %v388 = vmul.f32 %v387, 1.442695
    %v389 = vpow.pop %v388
    %v390 = vsel %vm215, %v389, 0.0
    %391 = vadd.xlane.f32.xlu0 %v390
    %v392 = vpop.xlane.xlu0 %391
    %v393 = vrcp.pop %v392
    %v394 = vmul.f32 %v389, %v393
    %s395 = scalar_lea.vmem [#allocation15], 16
    %396 = vst.msk [vmem:[%s395] sm:$0xff] %vm215, %v394
    %397 = vrot.lane.b32.xlu0 %v209, 112
    %v398 = vpop.permute.xlu0 %397
    %v401 = vsel %vm215, %v394, 0
    %403 = vmatpush.msra.mxu0 0.0
    %404 = vmatpush.msra.mxu0 0.0
    %405 = vmatpush.msra.mxu0 0.0
    %406 = vmatpush.msra.mxu0 0.0
    %407 = vmatpush.msra.mxu0 0.0
    %408 = vmatpush.msra.mxu0 0.0
    %409 = vmatpush.msra.mxu0 0.0
    %410 = vmatpush.msra.mxu0 0.0
    %411 = vmatpush.msra.mxu0 0.0
    %412 = vmatpush.msra.mxu0 0.0
    %413 = vmatpush.msra.mxu0 0.0
    %414 = vmatpush.msra.mxu0 0.0
    %415 = vmatpush.msra.mxu0 0.0
    %416 = vmatpush.msra.mxu0 0.0
    %417 = vmatpush.msra.mxu0 0.0
    %418 = vmatpush.msra.mxu0 %v398
    %419 = vmatmul.f32.gmra.mxu0 %v401
    %v420 = vpop.f32.mrf.mxu0
    %v421 = vadd.f32 0.0, %v420
    %422 = vdwg.mxu0
    %424 = vrot.lane.b32.xlu0 %v421, 16
    %v425 = vpop.permute.xlu0 %424
    %vm427 = vcmask 195712
    %428 = vst.msk [vmem:[#allocation2] sm:$0xff] %vm427, %v425
    %s429 = scalar_lea.vmem [#allocation12], 24
    %v430 = vld [vmem:[%s429] sm:$0xff]
    %431 = vrot.lane.b32.xlu0 %v155, 104
    %v432 = vpop.permute.xlu0 %431
    %433 = vrot.lane.b32.xlu0 %v182, 104
    %v434 = vpop.permute.xlu0 %433
    %v435 = vsel %vm215, %v432, 0
    %v437 = vsel %vm215, %v434, 0
    %439 = vmatpush.xpose.msra.mxu0 0.0
    %440 = vmatpush.xpose.msra.mxu0 0.0
    %441 = vmatpush.xpose.msra.mxu0 0.0
    %442 = vmatpush.xpose.msra.mxu0 0.0
    %443 = vmatpush.xpose.msra.mxu0 0.0
    %444 = vmatpush.xpose.msra.mxu0 0.0
    %445 = vmatpush.xpose.msra.mxu0 0.0
    %446 = vmatpush.xpose.msra.mxu0 0.0
    %447 = vmatpush.xpose.msra.mxu0 0.0
    %448 = vmatpush.xpose.msra.mxu0 0.0
    %449 = vmatpush.xpose.msra.mxu0 0.0
    %450 = vmatpush.xpose.msra.mxu0 0.0
    %451 = vmatpush.xpose.msra.mxu0 0.0
    %452 = vmatpush.xpose.msra.mxu0 0.0
    %453 = vmatpush.xpose.msra.mxu0 0.0
    %454 = vmatpush.xpose.msra.mxu0 %v437
    %455 = vmatmul.f32.gmra.mxu0 %v435
    %v456 = vpop.f32.mrf.mxu0
    %v457 = vadd.f32 %v430, %v456
    %458 = vdwg.mxu0
    %v459 = vsel %vm215, %v457, -inf
    %460 = vmax.xlane.f32.xlu0 %v459
    %v461 = vpop.xlane.xlu0 %460
    %v462 = vsub.f32 %v457, %v461
    %v463 = vmul.f32 %v462, 1.442695
    %v464 = vpow.pop %v463
    %v465 = vsel %vm215, %v464, 0.0
    %466 = vadd.xlane.f32.xlu0 %v465
    %v467 = vpop.xlane.xlu0 %466
    %v468 = vrcp.pop %v467
    %v469 = vmul.f32 %v464, %v468
    %s470 = scalar_lea.vmem [#allocation15], 24
    %471 = vst.msk [vmem:[%s470] sm:$0xff] %vm215, %v469
    %472 = vrot.lane.b32.xlu0 %v209, 104
    %v473 = vpop.permute.xlu0 %472
    %v476 = vsel %vm215, %v469, 0
    %478 = vmatpush.msra.mxu0 0.0
    %479 = vmatpush.msra.mxu0 0.0
    %480 = vmatpush.msra.mxu0 0.0
    %481 = vmatpush.msra.mxu0 0.0
    %482 = vmatpush.msra.mxu0 0.0
    %483 = vmatpush.msra.mxu0 0.0
    %484 = vmatpush.msra.mxu0 0.0
    %485 = vmatpush.msra.mxu0 0.0
    %486 = vmatpush.msra.mxu0 0.0
    %487 = vmatpush.msra.mxu0 0.0
    %488 = vmatpush.msra.mxu0 0.0
    %489 = vmatpush.msra.mxu0 0.0
    %490 = vmatpush.msra.mxu0 0.0
    %491 = vmatpush.msra.mxu0 0.0
    %492 = vmatpush.msra.mxu0 0.0
    %493 = vmatpush.msra.mxu0 %v473
    %494 = vmatmul.f32.gmra.mxu0 %v476
    %v495 = vpop.f32.mrf.mxu0
    %v496 = vadd.f32 0.0, %v495
    %497 = vdwg.mxu0
    %499 = vrot.lane.b32.xlu0 %v496, 24
    %v500 = vpop.permute.xlu0 %499
    %vm502 = vcmask 261312
    %503 = vst.msk [vmem:[#allocation2] sm:$0xff] %vm502, %v500
    %v504 = vld [vmem:[#allocation12] sm:$0xff]
    %v506 = vsel %vm215, %v158, 0
    %v509 = vsel %vm215, %v185, 0
    %511 = vmatpush.xpose.msra.mxu0 0.0
    %512 = vmatpush.xpose.msra.mxu0 0.0
    %513 = vmatpush.xpose.msra.mxu0 0.0
    %514 = vmatpush.xpose.msra.mxu0 0.0
    %515 = vmatpush.xpose.msra.mxu0 0.0
    %516 = vmatpush.xpose.msra.mxu0 0.0
    %517 = vmatpush.xpose.msra.mxu0 0.0
    %518 = vmatpush.xpose.msra.mxu0 0.0
    %519 = vmatpush.xpose.msra.mxu0 0.0
    %520 = vmatpush.xpose.msra.mxu0 0.0
    %521 = vmatpush.xpose.msra.mxu0 0.0
    %522 = vmatpush.xpose.msra.mxu0 0.0
    %523 = vmatpush.xpose.msra.mxu0 0.0
    %524 = vmatpush.xpose.msra.mxu0 0.0
    %525 = vmatpush.xpose.msra.mxu0 0.0
    %526 = vmatpush.xpose.msra.mxu0 %v509
    %527 = vmatmul.f32.gmra.mxu0 %v506
    %v528 = vpop.f32.mrf.mxu0
    %v529 = vadd.f32 %v504, %v528
    %530 = vdwg.mxu0
    %v531 = vsel %vm215, %v529, -inf
    %532 = vmax.xlane.f32.xlu0 %v531
    %v533 = vpop.xlane.xlu0 %532
    %v534 = vsub.f32 %v529, %v533
    %v535 = vmul.f32 %v534, 1.442695
    %v536 = vpow.pop %v535
    %v537 = vsel %vm215, %v536, 0.0
    %538 = vadd.xlane.f32.xlu0 %v537
    %v539 = vpop.xlane.xlu0 %538
    %v540 = vrcp.pop %v539
    %v541 = vmul.f32 %v536, %v540
    %s542 = scalar_lea.vmem [#allocation15], 32
    %543 = vst.msk [vmem:[%s542] sm:$0xff] %vm215, %v541
    %v545 = vsel %vm215, %v541, 0
    %547 = vmatpush.msra.mxu0 0.0
    %548 = vmatpush.msra.mxu0 0.0
    %549 = vmatpush.msra.mxu0 0.0
    %550 = vmatpush.msra.mxu0 0.0
    %551 = vmatpush.msra.mxu0 0.0
    %552 = vmatpush.msra.mxu0 0.0
    %553 = vmatpush.msra.mxu0 0.0
    %554 = vmatpush.msra.mxu0 0.0
    %555 = vmatpush.msra.mxu0 0.0
    %556 = vmatpush.msra.mxu0 0.0
    %557 = vmatpush.msra.mxu0 0.0
    %558 = vmatpush.msra.mxu0 0.0
    %559 = vmatpush.msra.mxu0 0.0
    %560 = vmatpush.msra.mxu0 0.0
    %561 = vmatpush.msra.mxu0 0.0
    %562 = vmatpush.msra.mxu0 %v212
    %563 = vmatmul.f32.gmra.mxu0 %v545
    %v564 = vpop.f32.mrf.mxu0
    %v565 = vadd.f32 0.0, %v564
    %566 = vdwg.mxu0
    %567 = vst.msk [vmem:[#allocation2 + $0x8] sm:$0xff] %vm215, %v565
    %v568 = vld [vmem:[%s278] sm:$0xff]
    %569 = vrot.lane.b32.xlu0 %v158, 120
    %v570 = vpop.permute.xlu0 %569
    %571 = vrot.lane.b32.xlu0 %v185, 120
    %v572 = vpop.permute.xlu0 %571
    %v573 = vsel %vm215, %v570, 0
    %v575 = vsel %vm215, %v572, 0
    %577 = vmatpush.xpose.msra.mxu0 0.0
    %578 = vmatpush.xpose.msra.mxu0 0.0
    %579 = vmatpush.xpose.msra.mxu0 0.0
    %580 = vmatpush.xpose.msra.mxu0 0.0
    %581 = vmatpush.xpose.msra.mxu0 0.0
    %582 = vmatpush.xpose.msra.mxu0 0.0
    %583 = vmatpush.xpose.msra.mxu0 0.0
    %584 = vmatpush.xpose.msra.mxu0 0.0
    %585 = vmatpush.xpose.msra.mxu0 0.0
    %586 = vmatpush.xpose.msra.mxu0 0.0
    %587 = vmatpush.xpose.msra.mxu0 0.0
    %588 = vmatpush.xpose.msra.mxu0 0.0
    %589 = vmatpush.xpose.msra.mxu0 0.0
    %590 = vmatpush.xpose.msra.mxu0 0.0
    %591 = vmatpush.xpose.msra.mxu0 0.0
    %592 = vmatpush.xpose.msra.mxu0 %v575
    %593 = vmatmul.f32.gmra.mxu0 %v573
    %v594 = vpop.f32.mrf.mxu0
    %v595 = vadd.f32 %v568, %v594
    %596 = vdwg.mxu0
    %v597 = vsel %vm215, %v595, -inf
    %598 = vmax.xlane.f32.xlu0 %v597
    %v599 = vpop.xlane.xlu0 %598
    %v600 = vsub.f32 %v595, %v599
    %v601 = vmul.f32 %v600, 1.442695
    %v602 = vpow.pop %v601
    %v603 = vsel %vm215, %v602, 0.0
    %604 = vadd.xlane.f32.xlu0 %v603
    %v605 = vpop.xlane.xlu0 %604
    %v606 = vrcp.pop %v605
    %v607 = vmul.f32 %v602, %v606
    %s608 = scalar_lea.vmem [#allocation15], 40
    %609 = vst.msk [vmem:[%s608] sm:$0xff] %vm215, %v607
    %611 = vrot.lane.b32.xlu0 %v212, 120
    %v612 = vpop.permute.xlu0 %611
    %v615 = vsel %vm215, %v607, 0
    %617 = vmatpush.msra.mxu0 0.0
    %618 = vmatpush.msra.mxu0 0.0
    %619 = vmatpush.msra.mxu0 0.0
    %620 = vmatpush.msra.mxu0 0.0
    %621 = vmatpush.msra.mxu0 0.0
    %622 = vmatpush.msra.mxu0 0.0
    %623 = vmatpush.msra.mxu0 0.0
    %624 = vmatpush.msra.mxu0 0.0
    %625 = vmatpush.msra.mxu0 0.0
    %626 = vmatpush.msra.mxu0 0.0
    %627 = vmatpush.msra.mxu0 0.0
    %628 = vmatpush.msra.mxu0 0.0
    %629 = vmatpush.msra.mxu0 0.0
    %630 = vmatpush.msra.mxu0 0.0
    %631 = vmatpush.msra.mxu0 0.0
    %632 = vmatpush.msra.mxu0 %v612
    %633 = vmatmul.f32.gmra.mxu0 %v615
    %v634 = vpop.f32.mrf.mxu0
    %v635 = vadd.f32 0.0, %v634
    %636 = vdwg.mxu0
    %638 = vrot.lane.b32.xlu0 %v635, 8
    %v639 = vpop.permute.xlu0 %638
    %641 = vst.msk [vmem:[#allocation2 + $0x8] sm:$0xff] %vm352, %v639
    %v642 = vld [vmem:[%s354] sm:$0xff]
    %643 = vrot.lane.b32.xlu0 %v158, 112
    %v644 = vpop.permute.xlu0 %643
    %645 = vrot.lane.b32.xlu0 %v185, 112
    %v646 = vpop.permute.xlu0 %645
    %v647 = vsel %vm215, %v644, 0
    %v649 = vsel %vm215, %v646, 0
    %651 = vmatpush.xpose.msra.mxu0 0.0
    %652 = vmatpush.xpose.msra.mxu0 0.0
    %653 = vmatpush.xpose.msra.mxu0 0.0
    %654 = vmatpush.xpose.msra.mxu0 0.0
    %655 = vmatpush.xpose.msra.mxu0 0.0
    %656 = vmatpush.xpose.msra.mxu0 0.0
    %657 = vmatpush.xpose.msra.mxu0 0.0
    %658 = vmatpush.xpose.msra.mxu0 0.0
    %659 = vmatpush.xpose.msra.mxu0 0.0
    %660 = vmatpush.xpose.msra.mxu0 0.0
    %661 = vmatpush.xpose.msra.mxu0 0.0
    %662 = vmatpush.xpose.msra.mxu0 0.0
    %663 = vmatpush.xpose.msra.mxu0 0.0
    %664 = vmatpush.xpose.msra.mxu0 0.0
    %665 = vmatpush.xpose.msra.mxu0 0.0
    %666 = vmatpush.xpose.msra.mxu0 %v649
    %667 = vmatmul.f32.gmra.mxu0 %v647
    %v668 = vpop.f32.mrf.mxu0
    %v669 = vadd.f32 %v642, %v668
    %670 = vdwg.mxu0
    %v671 = vsel %vm215, %v669, -inf
    %672 = vmax.xlane.f32.xlu0 %v671
    %v673 = vpop.xlane.xlu0 %672
    %v674 = vsub.f32 %v669, %v673
    %v675 = vmul.f32 %v674, 1.442695
    %v676 = vpow.pop %v675
    %v677 = vsel %vm215, %v676, 0.0
    %678 = vadd.xlane.f32.xlu0 %v677
    %v679 = vpop.xlane.xlu0 %678
    %v680 = vrcp.pop %v679
    %v681 = vmul.f32 %v676, %v680
    %s682 = scalar_lea.vmem [#allocation15], 48
    %683 = vst.msk [vmem:[%s682] sm:$0xff] %vm215, %v681
    %684 = vrot.lane.b32.xlu0 %v212, 112
    %v685 = vpop.permute.xlu0 %684
    %v688 = vsel %vm215, %v681, 0
    %690 = vmatpush.msra.mxu0 0.0
    %691 = vmatpush.msra.mxu0 0.0
    %692 = vmatpush.msra.mxu0 0.0
    %693 = vmatpush.msra.mxu0 0.0
    %694 = vmatpush.msra.mxu0 0.0
    %695 = vmatpush.msra.mxu0 0.0
    %696 = vmatpush.msra.mxu0 0.0
    %697 = vmatpush.msra.mxu0 0.0
    %698 = vmatpush.msra.mxu0 0.0
    %699 = vmatpush.msra.mxu0 0.0
    %700 = vmatpush.msra.mxu0 0.0
    %701 = vmatpush.msra.mxu0 0.0
    %702 = vmatpush.msra.mxu0 0.0
    %703 = vmatpush.msra.mxu0 0.0
    %704 = vmatpush.msra.mxu0 0.0
    %705 = vmatpush.msra.mxu0 %v685
    %706 = vmatmul.f32.gmra.mxu0 %v688
    %v707 = vpop.f32.mrf.mxu0
    %v708 = vadd.f32 0.0, %v707
    %709 = vdwg.mxu0
    %711 = vrot.lane.b32.xlu0 %v708, 16
    %v712 = vpop.permute.xlu0 %711
    %714 = vst.msk [vmem:[#allocation2 + $0x8] sm:$0xff] %vm427, %v712
    %v715 = vld [vmem:[%s429] sm:$0xff]
    %716 = vrot.lane.b32.xlu0 %v158, 104
    %v717 = vpop.permute.xlu0 %716
    %718 = vrot.lane.b32.xlu0 %v185, 104
    %v719 = vpop.permute.xlu0 %718
    %v720 = vsel %vm215, %v717, 0
    %v722 = vsel %vm215, %v719, 0
    %724 = vmatpush.xpose.msra.mxu0 0.0
    %725 = vmatpush.xpose.msra.mxu0 0.0
    %726 = vmatpush.xpose.msra.mxu0 0.0
    %727 = vmatpush.xpose.msra.mxu0 0.0
    %728 = vmatpush.xpose.msra.mxu0 0.0
    %729 = vmatpush.xpose.msra.mxu0 0.0
    %730 = vmatpush.xpose.msra.mxu0 0.0
    %731 = vmatpush.xpose.msra.mxu0 0.0
    %732 = vmatpush.xpose.msra.mxu0 0.0
    %733 = vmatpush.xpose.msra.mxu0 0.0
    %734 = vmatpush.xpose.msra.mxu0 0.0
    %735 = vmatpush.xpose.msra.mxu0 0.0
    %736 = vmatpush.xpose.msra.mxu0 0.0
    %737 = vmatpush.xpose.msra.mxu0 0.0
    %738 = vmatpush.xpose.msra.mxu0 0.0
    %739 = vmatpush.xpose.msra.mxu0 %v722
    %740 = vmatmul.f32.gmra.mxu0 %v720
    %v741 = vpop.f32.mrf.mxu0
    %v742 = vadd.f32 %v715, %v741
    %743 = vdwg.mxu0
    %v744 = vsel %vm215, %v742, -inf
    %745 = vmax.xlane.f32.xlu0 %v744
    %v746 = vpop.xlane.xlu0 %745
    %v747 = vsub.f32 %v742, %v746
    %v748 = vmul.f32 %v747, 1.442695
    %v749 = vpow.pop %v748
    %v750 = vsel %vm215, %v749, 0.0
    %751 = vadd.xlane.f32.xlu0 %v750
    %v752 = vpop.xlane.xlu0 %751
    %v753 = vrcp.pop %v752
    %v754 = vmul.f32 %v749, %v753
    %s755 = scalar_lea.vmem [#allocation15], 56
    %756 = vst.msk [vmem:[%s755] sm:$0xff] %vm215, %v754
    %757 = vrot.lane.b32.xlu0 %v212, 104
    %v758 = vpop.permute.xlu0 %757
    %v761 = vsel %vm215, %v754, 0
    %763 = vmatpush.msra.mxu0 0.0
    %764 = vmatpush.msra.mxu0 0.0
    %765 = vmatpush.msra.mxu0 0.0
    %766 = vmatpush.msra.mxu0 0.0
    %767 = vmatpush.msra.mxu0 0.0
    %768 = vmatpush.msra.mxu0 0.0
    %769 = vmatpush.msra.mxu0 0.0
    %770 = vmatpush.msra.mxu0 0.0
    %771 = vmatpush.msra.mxu0 0.0
    %772 = vmatpush.msra.mxu0 0.0
    %773 = vmatpush.msra.mxu0 0.0
    %774 = vmatpush.msra.mxu0 0.0
    %775 = vmatpush.msra.mxu0 0.0
    %776 = vmatpush.msra.mxu0 0.0
    %777 = vmatpush.msra.mxu0 0.0
    %778 = vmatpush.msra.mxu0 %v758
    %779 = vmatmul.f32.gmra.mxu0 %v761
    %v780 = vpop.f32.mrf.mxu0
    %v781 = vadd.f32 0.0, %v780
    %782 = vdwg.mxu0
    %784 = vrot.lane.b32.xlu0 %v781, 24
    %v785 = vpop.permute.xlu0 %784
    %787 = vst.msk [vmem:[#allocation2 + $0x8] sm:$0xff] %vm502, %v785
    %v788 = vld [vmem:[#allocation2] sm:$0xff]
    %v789 = vld [vmem:[#allocation2 + $0x8] sm:$0xff]
    %v790 = vld [vmem:[#allocation11] sm:$0xff]
    %v791 = vld [vmem:[#allocation11 + $0x8] sm:$0xff]
    %v792 = vld [vmem:[#allocation11 + $0x10] sm:$0xff]
    %v793 = vld [vmem:[#allocation11 + $0x18] sm:$0xff]
    %v794 = vld [vmem:[%s5] sm:$0x1]
    %v796 = vperm.slane %v794, 0
    %v799 = vsel %vm130, %v788, 0
    %v802 = vsel %vm130, %v789, 0
    %804 = vmatpush.msra.mxu0 0.0
    %805 = vmatpush.msra.mxu0 0.0
    %806 = vmatpush.msra.mxu0 0.0
    %807 = vmatpush.msra.mxu0 0.0
    %808 = vmatpush.msra.mxu0 0.0
    %809 = vmatpush.msra.mxu0 0.0
    %810 = vmatpush.msra.mxu0 0.0
    %811 = vmatpush.msra.mxu0 0.0
    %812 = vmatpush.msra.mxu0 0.0
    %813 = vmatpush.msra.mxu0 0.0
    %814 = vmatpush.msra.mxu0 0.0
    %815 = vmatpush.msra.mxu0 0.0
    %816 = vmatpush.msra.mxu0 %v793
    %817 = vmatpush.msra.mxu0 %v792
    %818 = vmatpush.msra.mxu0 %v791
    %819 = vmatpush.msra.mxu0 %v790
    %820 = vmatmul.f32.gmra.mxu0 %v799
    %v821 = vpop.f32.mrf.mxu0
    %v822 = vadd.f32 %v796, %v821
    %823 = vmatmul.f32.gmra.mxu0 %v802
    %v824 = vpop.f32.mrf.mxu0
    %v825 = vadd.f32 %v796, %v824
    %826 = vdwg.mxu0
    %827 = vst.msk [vmem:[#allocation14] sm:$0xff] %vm130, %v822
    %828 = vst.msk [vmem:[#allocation14 + $0x8] sm:$0xff] %vm130, %v825
    // Predicated region
    $region54: #{tpu_custom_call.1} parent=1 // pred_check
      _
    $region55: #{tpu_custom_call.1} parent=1 // pred_check_branch
      %830 = sbr.rel (0) target = $region57
    $region56: #{tpu_custom_call.1} parent=1 // pred_region
      %832 = vsyncadd [#allocation5], 0
      %s833 = sshll.u32 [#allocation14], 4
      %s834 = int_to_ptr.vmem [resolvable:$true] %s833
      %s835 = sshll.u32 %s7, 4
      %s836 = int_to_ptr.hbm [resolvable:$true] %s835
      %841 = dma.vmem_to_hbm [thread:$0]  %s834, 256, %s836, [#allocation5], 128, 128, 8
    $region57: #{tpu_custom_call.1} parent=1 // pred_fallthru
      _
    // Predicated region
    $region58: #{tpu_custom_call.1} parent=1 // pred_check
      _
    $region59: #{tpu_custom_call.1} parent=1 // pred_check_branch
      %843 = sbr.rel (0) target = $region61
    $region60: #{tpu_custom_call.1} parent=1 // pred_region
      %845 = vsyncadd [#allocation16], 0
      %s846 = sshll.u32 [#allocation15], 4
      %s847 = int_to_ptr.vmem [resolvable:$true] %s846
      %s848 = sshll.u32 %s8, 4
      %s849 = int_to_ptr.hbm [resolvable:$true] %s848
      %854 = dma.vmem_to_hbm [thread:$0]  %s847, 1024, %s849, [#allocation16], 128, 128, 8
    $region61: #{tpu_custom_call.1} parent=1 // pred_fallthru
      _
    // Predicated region
    $region62: #{tpu_custom_call.1} parent=1 // pred_check
      _
    $region63: #{tpu_custom_call.1} parent=1 // pred_check_branch
      %856 = sbr.rel (0) target = $region65
    $region64: #{tpu_custom_call.1} parent=1 // pred_region
      %858 = dma.done [#allocation5], 256
    $region65: #{tpu_custom_call.1} parent=1 // pred_fallthru
      _
    // Predicated region
    $region66: #{tpu_custom_call.1} parent=1 // pred_check
      _
    $region67: #{tpu_custom_call.1} parent=1 // pred_check_branch
      %860 = sbr.rel (0) target = $region69
    $region68: #{tpu_custom_call.1} parent=1 // pred_region
      %862 = dma.done [#allocation16], 1024
    $region69: #{tpu_custom_call.1} parent=1 // pred_fallthru
      _
    %863 = vsyncpa [#allocation4], 1
    %864 = vsyncpa [#allocation7], 1
    %865 = vsyncpa [#allocation10], 1
    %866 = vsyncpa [#allocation13], 1
    %867 = vsyncpa [#allocation5], 1
    %868 = vsyncpa [#allocation16], 1

</llo_original>
